<compile_context>
chip_gen: v7x
topology: tpu7x:2x2x1
jax: 0.10.0
libtpu: 0.0.40
codegen_flags: <defaults>
</compile_context>

<pallas_src>
import jax
import jax.numpy as jnp
from jax.experimental import pallas as pl
from jax.experimental.pallas import tpu as pltpu


def _linear_tanh_kernel(x_ref, w_ref, b_ref, o_ref):
    # x_ref: (TM, K), w_ref: (K, N), b_ref: (1, N), o_ref: (TM, N)
    y = jnp.dot(x_ref[...], w_ref[...], preferred_element_type=jnp.float32)
    y = y + b_ref[...]                    # broadcast bias over rows
    o_ref[...] = jnp.tanh(y).astype(o_ref.dtype)


def _call_linear_tanh(xin, win, bin2d, *, block_rows, cost):
    """tanh(xin @ win + bin2d), either as one VMEM-resident call (single tile)
    or as a 1-D parallel row-tiled grid (no pad, no output slice)."""
    rows, k = xin.shape
    n = win.shape[1]

    tm = max(8, (block_rows // 8) * 8)

    if rows <= tm:
        # One tile: no grid, no pipelining overhead, everything VMEM-resident.
        return pl.pallas_call(
            _linear_tanh_kernel,
            out_shape=jax.ShapeDtypeStruct((rows, n), xin.dtype),
            in_specs=[
                pl.BlockSpec(memory_space=pltpu.MemorySpace.VMEM),
                pl.BlockSpec(memory_space=pltpu.MemorySpace.VMEM),
                pl.BlockSpec(memory_space=pltpu.MemorySpace.VMEM),
            ],
            out_specs=pl.BlockSpec(memory_space=pltpu.MemorySpace.VMEM),
            cost_estimate=cost,
        )(xin, win, bin2d)

    # Row-tiled grid; ragged final block handled by Pallas' masked writeback
    # (safe: no cross-row reduction inside the kernel).
    n_blocks = pl.cdiv(rows, tm)
    return pl.pallas_call(
        _linear_tanh_kernel,
        out_shape=jax.ShapeDtypeStruct((rows, n), xin.dtype),
        grid=(n_blocks,),
        in_specs=[
            pl.BlockSpec((tm, k), lambda i: (i, 0)),   # streamed x tiles
            pl.BlockSpec((k, n), lambda i: (0, 0)),    # weight VMEM-resident
            pl.BlockSpec((1, n), lambda i: (0, 0)),    # bias VMEM-resident
        ],
        out_specs=pl.BlockSpec((tm, n), lambda i: (i, 0)),
        compiler_params=pltpu.CompilerParams(
            dimension_semantics=("parallel",),         # megacore / 2-TC shardable
            vmem_limit_bytes=32 * 1024 * 1024,         # headroom (v5e default is 16 MiB)
        ),
        cost_estimate=cost,
    )(xin, win, bin2d)


def make_one_layer_tanh(w, b, *, block_rows=16384):
    """Build a jitted forward for OneLayerTanhNetwork from PyTorch-layout params.

    w: (nout, nin) f32  (nn.Linear weight layout), b: (nout,) f32
    Returns forward(x: (B, nin)) -> (B, nout) = tanh(x @ w.T + b).
    Weight preparation (transpose / bias reshape / lane-packed block-diagonal
    weight) is done once here, not per call.
    """
    w = jnp.asarray(w)
    b = jnp.asarray(b)
    nout, nin = w.shape

    wt = w.T                              # (nin, nout)
    b2d = b.reshape(1, nout)

    # Lane-packing factor: P consecutive batch rows per 128-lane vector row.
    pack = 128 // nin if (0 < nin <= 128 and 128 % nin == 0) else 1
    if pack > 1:
        eye = jnp.eye(pack, dtype=wt.dtype)
        # Block-diagonal (pack*nin, pack*nout) with wt on the diagonal blocks.
        w_packed = (eye[:, None, :, None] * wt[None, :, None, :]).reshape(
            pack * nin, pack * nout)
        b_packed = jnp.tile(b, pack).reshape(1, pack * nout)
    else:
        w_packed, b_packed = wt, b2d

    @jax.jit
    def forward(x):
        B = x.shape[0]
        cost = pl.CostEstimate(
            flops=2 * B * nin * nout,
            transcendentals=B * nout,
            bytes_accessed=4 * (B * nin + B * nout + nin * nout + nout),
        )
        if pack > 1 and B % pack == 0:
            xp = x.reshape(B // pack, pack * nin)          # free, row-major
            out = _call_linear_tanh(
                xp, w_packed, b_packed,
                block_rows=max(8, block_rows // pack), cost=cost)
            return out.reshape(B, nout)                    # free, row-major
        # Fallback: B not a multiple of the packing factor (or nin doesn't pack).
        return _call_linear_tanh(x, wt, b2d, block_rows=block_rows, cost=cost)

    return forward


if __name__ == "__main__":
    NIN, NOUT = 32, 10                    # nout=10 is fixed by the module
    key = jax.random.PRNGKey(0)
    kw, kb, kx1, kx2, kx3 = jax.random.split(key, 5)

    # PyTorch nn.Linear default init: U(-1/sqrt(nin), 1/sqrt(nin)), W is (nout, nin).
    bound = 1.0 / (NIN ** 0.5)
    w = jax.random.uniform(kw, (NOUT, NIN), jnp.float32, -bound, bound)
    b = jax.random.uniform(kb, (NOUT,), jnp.float32, -bound, bound)

    forward = make_one_layer_tanh(w, b)                        # default big tiles
    forward_tiled = make_one_layer_tanh(w, b, block_rows=64)   # force the grid path

    def ref(x):
        return jnp.tanh(x @ w.T + b[None, :])

    # (1) Small batch, lane-packed single-tile path (B % 4 == 0).
    x1 = jax.random.normal(kx1, (8, NIN), jnp.float32)
    o1 = jax.block_until_ready(forward(x1))
    assert o1.shape == (8, NOUT)
    assert jnp.allclose(o1, ref(x1), atol=1e-5, rtol=1e-5)

    # (2) Batch not a multiple of the packing factor -> unpacked fallback path.
    x2 = jax.random.normal(kx2, (6, NIN), jnp.float32)
    o2 = jax.block_until_ready(forward(x2))
    assert o2.shape == (6, NOUT)
    assert jnp.allclose(o2, ref(x2), atol=1e-5, rtol=1e-5)

    # (3) Row-tiled "parallel" grid path with a ragged final block
    #     (160 rows -> 40 packed rows -> tiles of 16 -> grid of 3, tail of 8).
    x3 = jax.random.normal(kx3, (160, NIN), jnp.float32)
    o3 = jax.block_until_ready(forward_tiled(x3))
    assert o3.shape == (160, NOUT)
    assert jnp.allclose(o3, ref(x3), atol=1e-5, rtol=1e-5)

    print("KERNEL_OK")
</pallas_src>

<mosaic_0001>
module attributes {stable_mosaic.version = 11 : i64} {
  func.func @_linear_tanh_kernel(%arg0: memref<2x128xf32, #tpu.memory_space<vmem>>, %arg1: memref<128x40xf32, #tpu.memory_space<vmem>>, %arg2: memref<1x40xf32, #tpu.memory_space<vmem>>, %arg3: memref<2x40xf32, #tpu.memory_space<vmem>>) attributes {dimension_semantics = [], scalar_prefetch = 0 : i64, scratch_operands = 0 : i64, tpu.core_type = #tpu.core_type<tc>} {
    %c0 = arith.constant 0 : index
    %c0_0 = arith.constant 0 : index
    %0 = vector.load %arg0[%c0, %c0_0] : memref<2x128xf32, #tpu.memory_space<vmem>>, vector<2x128xf32>
    %c0_1 = arith.constant 0 : index
    %c0_2 = arith.constant 0 : index
    %1 = vector.load %arg1[%c0_1, %c0_2] : memref<128x40xf32, #tpu.memory_space<vmem>>, vector<128x40xf32>
    %cst = arith.constant dense<0.000000e+00> : vector<2x40xf32>
    %2 = tpu.matmul %0, %1, %cst {dimension_numbers = #tpu.dot_dimension_numbers<[1], [0], [0], [1], [0, 0, 1, 1], [], []>} : vector<2x128xf32>, vector<128x40xf32>, vector<2x40xf32> -> vector<2x40xf32>
    %c0_3 = arith.constant 0 : index
    %c0_4 = arith.constant 0 : index
    %3 = vector.load %arg2[%c0_3, %c0_4] : memref<1x40xf32, #tpu.memory_space<vmem>>, vector<1x40xf32>
    %4 = vector.broadcast %3 : vector<1x40xf32> to vector<2x40xf32>
    %5 = arith.addf %2, %4 : vector<2x40xf32>
    %6 = math.tanh %5 : vector<2x40xf32>
    %c0_5 = arith.constant 0 : index
    %c0_6 = arith.constant 0 : index
    %7 = vector.load %arg3[%c0_5, %c0_6] : memref<2x40xf32, #tpu.memory_space<vmem>>, vector<2x40xf32>
    tpu.vector_store %arg3[%c0_5, %c0_6], %6 {strides = array<i32>} : memref<2x40xf32, #tpu.memory_space<vmem>>, vector<2x40xf32>,
    return
  }
}

</mosaic_0001>

<llo_original>
// kernel: forward.1
$region0: #{forward.1}
  #allocation0 [shape = 'u32[]', space=smem, size = 0x4, offset = 0x4, fixed_abs, tag = 'smem constant byte address 0x4 - core index']
  #allocation1 [shape = 'u32[144,128]{1,0:T(1,128)}', space=vmem, size = 0x12000, scoped, tag = 'internal scratch']
  %s0 = inlined_call_operand.vmem [shape: f32[2,128], index: 0, kind: input, shape index: {}]
  %s1 = inlined_call_operand.hbm [shape: f32[128,40], index: 1, kind: input, shape index: {}]
  %s2 = inlined_call_operand.vmem [shape: f32[1,40], index: 2, kind: input, shape index: {}]
  %s3 = inlined_call_operand.vmem [shape: f32[2,40], index: 3, kind: output, shape index: {}]
  %s4 = sld [smem:[#allocation0]]
  $region26: #{forward.1} parent=0
    _
  %s6 = ssub.s32 1, %s4
  %s7 = scalar_select 0, %s6, %s4
  $region1: #{forward.1} parent=0
    #allocation2 [shape = 'u8[65536]{0}', space=vmem, size = 0x10000, scoped, tag = 'input window, operand 1, single buffered']
    #allocation3 [shape = 's32[1]{0}', space=sflag, size = 0x4, scoped, tag = 'scoped memory for forward.1']
    %8 = vsyncpa [#allocation3], 0
    // Predicated region
    $region2: #{forward.1} parent=1 // pred_check
      _
    $region3: #{forward.1} parent=1 // pred_check_branch
      %10 = sbr.rel (0) target = $region5
    $region4: #{forward.1} parent=1 // pred_region
      _
    $region5: #{forward.1} parent=1 // pred_fallthru
      _
    // Predicated region
    $region6: #{forward.1} parent=1 // pred_check
      _
    $region7: #{forward.1} parent=1 // pred_check_branch
      %12 = sbr.rel (0) target = $region9
    $region8: #{forward.1} parent=1 // pred_region
      %s14 = ssub.s32 2048, 2048
      %15 = vsyncadd [#allocation3], %s14
      %s16 = sshll.u32 [#allocation2], 4
      %s17 = int_to_ptr.vmem [resolvable:$true] %s16
      %22 = dma.hbm_to_vmem [thread:$0]  %s1, 2048, %s17, [#allocation3], 128, 128, 8
    $region9: #{forward.1} parent=1 // pred_fallthru
      _
    // Predicated region
    $region10: #{forward.1} parent=1 // pred_check
      _
    $region11: #{forward.1} parent=1 // pred_check_branch
      %24 = sbr.rel (0) target = $region13
    $region12: #{forward.1} parent=1 // pred_region
      _
    $region13: #{forward.1} parent=1 // pred_fallthru
      _
    // Predicated region
    $region14: #{forward.1} parent=1 // pred_check
      _
    $region15: #{forward.1} parent=1 // pred_check_branch
      %26 = sbr.rel (0) target = $region17
    $region16: #{forward.1} parent=1 // pred_region
      %27 = dma.done [#allocation3], 2048
    $region17: #{forward.1} parent=1 // pred_fallthru
      _
    %v28 = vld [vmem:[%s0] sm:$0x3]
    %v29 = vld [vmem:[#allocation2] sm:$0xff]
    %v30 = vld [vmem:[#allocation2 + $0x8] sm:$0xff]
    %v31 = vld [vmem:[#allocation2 + $0x10] sm:$0xff]
    %v32 = vld [vmem:[#allocation2 + $0x18] sm:$0xff]
    %v33 = vld [vmem:[#allocation2 + $0x20] sm:$0xff]
    %v34 = vld [vmem:[#allocation2 + $0x28] sm:$0xff]
    %v35 = vld [vmem:[#allocation2 + $0x30] sm:$0xff]
    %v36 = vld [vmem:[#allocation2 + $0x38] sm:$0xff]
    %v37 = vld [vmem:[#allocation2 + $0x40] sm:$0xff]
    %v38 = vld [vmem:[#allocation2 + $0x48] sm:$0xff]
    %v39 = vld [vmem:[#allocation2 + $0x50] sm:$0xff]
    %v40 = vld [vmem:[#allocation2 + $0x58] sm:$0xff]
    %v41 = vld [vmem:[#allocation2 + $0x60] sm:$0xff]
    %v42 = vld [vmem:[#allocation2 + $0x68] sm:$0xff]
    %v43 = vld [vmem:[#allocation2 + $0x70] sm:$0xff]
    %v44 = vld [vmem:[#allocation2 + $0x78] sm:$0xff]
    %v45 = vld [vmem:[%s2] sm:$0x1]
    %v47 = vlaneseq
    %v48 = vshrl.u32 %v47, 7
    %v49 = vsub.s32 0, %v48
    %v50 = vrot.slane %v45, %v49
    %52 = vmatprep.subr.mxu0 0.0
    %53 = vmatpush1.msra.mxu0 %v29
    %54 = vmatprep.subr.mxu0 0.0
    %55 = vmatpush1.msra.mxu0 %v30
    %56 = vmatprep.subr.mxu0 0.0
    %57 = vmatpush1.msra.mxu0 %v31
    %58 = vmatprep.subr.mxu0 0.0
    %59 = vmatpush1.msra.mxu0 %v32
    %60 = vmatprep.subr.mxu0 0.0
    %61 = vmatpush1.msra.mxu0 %v33
    %62 = vmatprep.subr.mxu0 0.0
    %63 = vmatpush1.msra.mxu0 %v34
    %64 = vmatprep.subr.mxu0 0.0
    %65 = vmatpush1.msra.mxu0 %v35
    %66 = vmatprep.subr.mxu0 0.0
    %67 = vmatpush1.msra.mxu0 %v36
    %68 = vmatprep.subr.mxu0 0.0
    %69 = vmatpush1.msra.mxu0 %v37
    %70 = vmatprep.subr.mxu0 0.0
    %71 = vmatpush1.msra.mxu0 %v38
    %72 = vmatprep.subr.mxu0 0.0
    %73 = vmatpush1.msra.mxu0 %v39
    %74 = vmatprep.subr.mxu0 0.0
    %75 = vmatpush1.msra.mxu0 %v40
    %76 = vmatprep.subr.mxu0 0.0
    %77 = vmatpush1.msra.mxu0 %v41
    %78 = vmatprep.subr.mxu0 0.0
    %79 = vmatpush1.msra.mxu0 %v42
    %80 = vmatprep.subr.mxu0 0.0
    %81 = vmatpush1.msra.mxu0 %v43
    %82 = vmatprep.subr.mxu0 0.0
    %83 = vmatpush1.msra.mxu0 %v44
    %84 = vmatprep.subr.mxu0 0.0
    %85 = vmatpush1.msra.mxu0 0.0
    %86 = vmatprep.subr.mxu0 0.0
    %87 = vmatpush1.msra.mxu0 0.0
    %88 = vmatprep.subr.mxu0 0.0
    %89 = vmatpush1.msra.mxu0 0.0
    %90 = vmatprep.subr.mxu0 0.0
    %91 = vmatpush1.msra.mxu0 0.0
    %92 = vmatprep.subr.mxu0 0.0
    %93 = vmatpush1.msra.mxu0 0.0
    %94 = vmatprep.subr.mxu0 0.0
    %95 = vmatpush1.msra.mxu0 0.0
    %96 = vmatprep.subr.mxu0 0.0
    %97 = vmatpush1.msra.mxu0 0.0
    %98 = vmatprep.subr.mxu0 0.0
    %99 = vmatpush1.msra.mxu0 0.0
    %100 = vmatprep.subr.mxu0 0.0
    %101 = vmatpush1.msra.mxu0 0.0
    %102 = vmatprep.subr.mxu0 0.0
    %103 = vmatpush1.msra.mxu0 0.0
    %104 = vmatprep.subr.mxu0 0.0
    %105 = vmatpush1.msra.mxu0 0.0
    %106 = vmatprep.subr.mxu0 0.0
    %107 = vmatpush1.msra.mxu0 0.0
    %108 = vmatprep.subr.mxu0 0.0
    %109 = vmatpush1.msra.mxu0 0.0
    %110 = vmatprep.subr.mxu0 0.0
    %111 = vmatpush1.msra.mxu0 0.0
    %112 = vmatprep.subr.mxu0 0.0
    %113 = vmatpush1.msra.mxu0 0.0
    %114 = vmatprep.subr.mxu0 0.0
    %115 = vmatpush1.msra.mxu0 0.0
    %116 = vmatprep.mubr.f32.mxu0 0.0
    %117 = vmatmul.mubr.f32.gmra.mrb[0].mxu0 %v28
    %v118 = vpop.f32.mrb[0].mxu0
    %v119 = vadd.f32 %v50, %v118
    %v120 = vpop.f32.mrb[0].mxu0
    %121 = vdwg.mxu0
    %v122 = vtanh.pop %v119
    %vm123 = vcmask 320512
    %124 = vst.msk [vmem:[%s3] sm:$0x3] %vm123, %v122
    // Predicated region
    $region18: #{forward.1} parent=1 // pred_check
      _
    $region19: #{forward.1} parent=1 // pred_check_branch
      %126 = sbr.rel (0) target = $region21
    $region20: #{forward.1} parent=1 // pred_region
      _
    $region21: #{forward.1} parent=1 // pred_fallthru
      _
    // Predicated region
    $region22: #{forward.1} parent=1 // pred_check
      _
    $region23: #{forward.1} parent=1 // pred_check_branch
      %128 = sbr.rel (0) target = $region25
    $region24: #{forward.1} parent=1 // pred_region
      _
    $region25: #{forward.1} parent=1 // pred_fallthru
      _
    %129 = vsyncpa [#allocation3], 1

</llo_original>
